<compile_context>
chip_gen: v6e
topology: v6e:2x2x1
jax: 0.10.0
libtpu: 0.0.40
codegen_flags: <defaults>
</compile_context>

<pallas_src>
import functools

import jax
import jax.numpy as jnp
import numpy as np
from jax import lax
from jax.experimental import pallas as pl
from jax.experimental.pallas import tpu as pltpu


# ----------------------------------------------------------------------------
# Pallas kernels
# ----------------------------------------------------------------------------
def _stats_kernel(mask_ref, *refs, n_layers, m_total, tm):
    """Accumulate per-layer masked sum and sum-of-squares.

    mask_ref:            (tm, 1) VMEM tile of the flattened mask (float)
    refs[:n_layers]:     (tm, D) VMEM tile of layer k
    refs[n_layers+0/1]:  (N, D)  resident f32 accumulators (sum, sum-of-squares)
    """
    x_refs = refs[:n_layers]
    sum_ref = refs[n_layers]
    sumsq_ref = refs[n_layers + 1]

    @pl.when(pl.program_id(0) == 0)
    def _():
        sum_ref[...] = jnp.zeros_like(sum_ref)
        sumsq_ref[...] = jnp.zeros_like(sumsq_ref)

    # Validity of each row of this tile (the last tile may extend past M; its
    # padded rows contain unspecified data that must not reach the sums).
    row = lax.broadcasted_iota(jnp.int32, (tm, 1), 0) + pl.program_id(0) * tm
    valid = row < m_total                                          # (tm, 1)
    m_eff = jnp.where(valid, mask_ref[...].astype(jnp.float32), 0.0)

    part_sum = []
    part_sq = []
    for k in range(n_layers):                  # static & small
        xk = x_refs[k][...].astype(jnp.float32)                    # (tm, D)
        xk = jnp.where(valid, xk, 0.0) * m_eff                     # masked
        part_sum.append(jnp.sum(xk, axis=0, keepdims=True))        # (1, D)
        part_sq.append(jnp.sum(xk * xk, axis=0, keepdims=True))    # (1, D)
    sum_ref[...] += jnp.concatenate(part_sum, axis=0)              # (N, D)
    sumsq_ref[...] += jnp.concatenate(part_sq, axis=0)


def _mix_kernel(coef_ref, *refs, n_layers):
    """out = sum_k coef[k] * x_k + coef[n_layers]  (folded bias term).

    coef_ref:        (n_layers + 1,) float32 in SMEM
    refs[:n_layers]: (tm, D) VMEM tiles of each layer
    refs[n_layers]:  (tm, D) output tile
    """
    x_refs = refs[:n_layers]
    o_ref = refs[n_layers]

    # Two independent accumulation chains give the scheduler a little ILP when
    # N is large; each layer is loaded and cast to f32 individually so the live
    # working set stays at ~2 tiles.
    acc0 = coef_ref[n_layers] + coef_ref[0] * x_refs[0][...].astype(jnp.float32)
    acc1 = None
    for k in range(1, n_layers):
        term = coef_ref[k] * x_refs[k][...].astype(jnp.float32)
        if k % 2 == 1:
            acc1 = term if acc1 is None else acc1 + term
        else:
            acc0 = acc0 + term
    if acc1 is not None:
        acc0 = acc0 + acc1
    o_ref[...] = acc0.astype(o_ref.dtype)


# ----------------------------------------------------------------------------
# Tile-size / VMEM-limit selection
# ----------------------------------------------------------------------------
def _vmem_capacity_bytes():
    try:
        return int(pltpu.get_tpu_info().vmem_capacity_bytes)
    except Exception:
        return 64 * 1024 * 1024   # conservative default (v7x per-TC VMEM)


def _tile_and_vmem(n_layers, d, in_itemsize, out_itemsize, m, tm=None):
    vmem_cap = _vmem_capacity_bytes()
    # Per tile row: double-buffered inputs + double-buffered output + f32 work.
    per_row = 2 * d * (n_layers * in_itemsize + out_itemsize) + 4 * d
    pack = max(8, 32 // max(in_itemsize, 1))    # 8 f32 / 16 bf16 / 32 int8
    if tm is None:
        tm = int(vmem_cap * 0.4) // max(per_row, 1)
        tm = max(pack, min(1024, (tm // pack) * pack))
        m_ceil = -(-m // pack) * pack
        tm = min(tm, m_ceil)
    else:
        tm = max(pack, -(-int(tm) // pack) * pack)   # round up to sublane pack
    need = tm * per_row + (8 << 20)
    vmem_limit = int(min(int(vmem_cap * 0.9), max(need, 32 << 20)))
    return tm, vmem_limit


# ----------------------------------------------------------------------------
# pallas_call wrappers
# ----------------------------------------------------------------------------
def _masked_stats(tensors2d, mask2d, *, tm, vmem_limit):
    n = len(tensors2d)
    m, d = tensors2d[0].shape
    in_itemsize = jnp.dtype(tensors2d[0].dtype).itemsize
    grid = (pl.cdiv(m, tm),)
    in_specs = ([pl.BlockSpec((tm, 1), lambda i: (i, 0))]
                + [pl.BlockSpec((tm, d), lambda i: (i, 0)) for _ in range(n)])
    cost = pl.CostEstimate(
        flops=4 * n * m * d,
        transcendentals=0,
        bytes_accessed=n * m * d * in_itemsize + m * 4 + 2 * n * d * 4)
    return pl.pallas_call(
        functools.partial(_stats_kernel, n_layers=n, m_total=m, tm=tm),
        out_shape=(jax.ShapeDtypeStruct((n, d), jnp.float32),
                   jax.ShapeDtypeStruct((n, d), jnp.float32)),
        grid=grid,
        in_specs=in_specs,
        out_specs=(pl.BlockSpec((n, d), lambda i: (0, 0)),
                   pl.BlockSpec((n, d), lambda i: (0, 0))),
        compiler_params=pltpu.CompilerParams(
            dimension_semantics=("arbitrary",),
            vmem_limit_bytes=vmem_limit),
        cost_estimate=cost,
    )(mask2d, *tensors2d)


def _weighted_mix(coefs, tensors2d, *, tm, out_dtype, vmem_limit):
    n = len(tensors2d)
    m, d = tensors2d[0].shape
    in_itemsize = jnp.dtype(tensors2d[0].dtype).itemsize
    out_itemsize = jnp.dtype(out_dtype).itemsize
    grid = (pl.cdiv(m, tm),)
    in_specs = ([pl.BlockSpec(memory_space=pltpu.MemorySpace.SMEM)]
                + [pl.BlockSpec((tm, d), lambda i: (i, 0)) for _ in range(n)])
    cost = pl.CostEstimate(
        flops=2 * n * m * d,
        transcendentals=0,
        bytes_accessed=n * m * d * in_itemsize + m * d * out_itemsize)
    return pl.pallas_call(
        functools.partial(_mix_kernel, n_layers=n),
        out_shape=jax.ShapeDtypeStruct((m, d), out_dtype),
        grid=grid,
        in_specs=in_specs,
        out_specs=pl.BlockSpec((tm, d), lambda i: (i, 0)),
        compiler_params=pltpu.CompilerParams(
            dimension_semantics=("parallel",),
            vmem_limit_bytes=vmem_limit),
        cost_estimate=cost,
    )(coefs, *tensors2d)


# ----------------------------------------------------------------------------
# Module (JAX glue around the Pallas kernels)
# ----------------------------------------------------------------------------
class ScalarMixWithDropout:
    def __init__(self, mixture_size, layer_dropout=0.0,
                 layer_dropout_replacement=-1e20, do_layer_norm=False,
                 initial_scalar_parameters=None, trainable=True):
        self.mixture_size = mixture_size
        self.do_layer_norm = do_layer_norm
        self.layer_dropout = layer_dropout
        self.layer_dropout_replacement = layer_dropout_replacement
        if initial_scalar_parameters is None:
            initial_scalar_parameters = [0.0] * mixture_size
        assert len(initial_scalar_parameters) == mixture_size
        # Parameters (deterministic init, mirroring the torch module shapes):
        self.scalar_parameters = jnp.asarray(initial_scalar_parameters,
                                             dtype=jnp.float32)
        self.gamma = jnp.asarray(1.0, dtype=jnp.float32)

    def __call__(self, tensors, mask=None, dropout_rng=None, tm=None):
        assert len(tensors) == self.mixture_size
        n = self.mixture_size
        b, t, d = tensors[0].shape
        m = b * t
        in_dtype = tensors[0].dtype
        # Free views (no HBM copy): each layer becomes (M, D).
        tensors2d = [x.reshape(m, d) for x in tensors]

        in_itemsize = jnp.dtype(in_dtype).itemsize
        tm, vmem_limit = _tile_and_vmem(n, d, in_itemsize, in_itemsize, m, tm=tm)

        weights = self.scalar_parameters
        if self.layer_dropout and dropout_rng is not None:
            u = jax.random.uniform(dropout_rng, (n,))
            weights = jnp.where(u > self.layer_dropout, weights,
                                jnp.float32(self.layer_dropout_replacement))
        normed = jax.nn.softmax(weights, axis=0)           # (N,)

        if not self.do_layer_norm:
            a = self.gamma * normed                         # (N,)
            bias = jnp.zeros((), jnp.float32)
        else:
            assert mask is not None
            mask_f = mask.astype(jnp.float32)               # (B, T)
            mask2d = mask_f.reshape(m, 1)
            num_not_masked = jnp.sum(mask_f) * d
            sums, sumsqs = _masked_stats(tensors2d, mask2d,
                                         tm=tm, vmem_limit=vmem_limit)  # (N, D)
            sum_k = jnp.sum(sums, axis=-1)                  # (N,)
            sumsq_k = jnp.sum(sumsqs, axis=-1)              # (N,)
            mean_k = sum_k / num_not_masked
            # NOTE: single-pass E[x^2]-mean^2 in f32 accumulators; adequate for
            # normalized activations (matches reference within f32 tolerance).
            var_k = jnp.maximum(sumsq_k / num_not_masked - mean_k ** 2, 0.0)
            inv_std = 1.0 / jnp.sqrt(var_k + 1e-12)
            # gamma * s_k * (x - mean_k) * inv_std_k  ==  a_k * x + b
            a = self.gamma * normed * inv_std               # (N,)
            bias = -jnp.sum(self.gamma * normed * mean_k * inv_std)

        coefs = jnp.concatenate([a, bias[None]]).astype(jnp.float32)   # (N+1,)
        out = _weighted_mix(coefs, tensors2d, tm=tm, out_dtype=in_dtype,
                            vmem_limit=vmem_limit)          # (M, D)
        return out.reshape(b, t, d)


# ----------------------------------------------------------------------------
# Pure JAX reference (mirrors the PyTorch forward exactly)
# ----------------------------------------------------------------------------
def scalar_mix_reference(tensors, scalar_parameters, gamma,
                         mask=None, do_layer_norm=False):
    s = jax.nn.softmax(scalar_parameters, axis=0)
    if not do_layer_norm:
        return gamma * sum(s[k] * tensors[k] for k in range(len(tensors)))
    mask_f = mask.astype(jnp.float32)
    bm = mask_f[..., None]
    d = tensors[0].shape[-1]
    num = jnp.sum(mask_f) * d

    def ln(t):
        t_masked = t * bm
        mean = jnp.sum(t_masked) / num
        var = jnp.sum(((t_masked - mean) * bm) ** 2) / num
        return (t - mean) / jnp.sqrt(var + 1e-12)

    return gamma * sum(s[k] * ln(tensors[k]) for k in range(len(tensors)))


# ----------------------------------------------------------------------------
# Demo / correctness check
# ----------------------------------------------------------------------------
if __name__ == "__main__":
    n_layers = 3
    init_params = [0.1, -0.2, 0.3]

    def make_inputs(batch, seq, hidden, key):
        ks = jax.random.split(key, n_layers + 1)
        tensors = [jax.random.normal(ks[i], (batch, seq, hidden), jnp.float32)
                   for i in range(n_layers)]
        mask = jax.random.uniform(ks[-1], (batch, seq)) > 0.3
        return tensors, mask

    tensors, mask = make_inputs(2, 8, 128, jax.random.PRNGKey(0))

    # --- path 1: no layer norm ------------------------------------------------
    mix_plain = ScalarMixWithDropout(n_layers, do_layer_norm=False,
                                     initial_scalar_parameters=init_params)
    out_plain = jax.block_until_ready(mix_plain(tensors))
    ref_plain = scalar_mix_reference(tensors, mix_plain.scalar_parameters,
                                     mix_plain.gamma, do_layer_norm=False)
    np.testing.assert_allclose(np.asarray(out_plain), np.asarray(ref_plain),
                               rtol=1e-5, atol=1e-5)

    # --- path 2: with masked layer norm ---------------------------------------
    mix_ln = ScalarMixWithDropout(n_layers, do_layer_norm=True,
                                  initial_scalar_parameters=init_params)
    out_ln = jax.block_until_ready(mix_ln(tensors, mask=mask))
    ref_ln = scalar_mix_reference(tensors, mix_ln.scalar_parameters,
                                  mix_ln.gamma, mask=mask, do_layer_norm=True)
    np.testing.assert_allclose(np.asarray(out_ln), np.asarray(ref_ln),
                               rtol=1e-4, atol=1e-4)

    # --- path 3: tail handling (M = 3*37 = 111 not a multiple of tm=64) -------
    tensors_odd, mask_odd = make_inputs(3, 37, 128, jax.random.PRNGKey(7))
    out_odd = jax.block_until_ready(mix_plain(tensors_odd, tm=64))
    ref_odd = scalar_mix_reference(tensors_odd, mix_plain.scalar_parameters,
                                   mix_plain.gamma, do_layer_norm=False)
    np.testing.assert_allclose(np.asarray(out_odd), np.asarray(ref_odd),
                               rtol=1e-5, atol=1e-5)

    out_odd_ln = jax.block_until_ready(mix_ln(tensors_odd, mask=mask_odd, tm=64))
    ref_odd_ln = scalar_mix_reference(tensors_odd, mix_ln.scalar_parameters,
                                      mix_ln.gamma, mask=mask_odd,
                                      do_layer_norm=True)
    np.testing.assert_allclose(np.asarray(out_odd_ln), np.asarray(ref_odd_ln),
                               rtol=1e-4, atol=1e-4)

    # --- path 4: layer dropout on the mixing weights (deterministic rng) ------
    mix_do = ScalarMixWithDropout(n_layers, layer_dropout=0.5,
                                  do_layer_norm=False,
                                  initial_scalar_parameters=init_params)
    rng = jax.random.PRNGKey(1)
    out_do = jax.block_until_ready(mix_do(tensors, dropout_rng=rng))
    u = jax.random.uniform(rng, (n_layers,))
    w_dropped = jnp.where(u > 0.5, mix_do.scalar_parameters, jnp.float32(-1e20))
    ref_do = scalar_mix_reference(tensors, w_dropped, mix_do.gamma,
                                  do_layer_norm=False)
    np.testing.assert_allclose(np.asarray(out_do), np.asarray(ref_do),
                               rtol=1e-5, atol=1e-5)

    print("KERNEL_OK")
</pallas_src>

<mosaic_0001>
module attributes {stable_mosaic.version = 11 : i64} {
  func.func @_mix_kernel(%arg0: i32, %arg1: memref<4xf32, #tpu.memory_space<smem>>, %arg2: memref<16x128xf32, #tpu.memory_space<vmem>>, %arg3: memref<16x128xf32, #tpu.memory_space<vmem>>, %arg4: memref<16x128xf32, #tpu.memory_space<vmem>>, %arg5: memref<16x128xf32, #tpu.memory_space<vmem>>) attributes {dimension_semantics = [#tpu.dimension_semantics<parallel>], iteration_bounds = array<i64: 1>, scalar_prefetch = 0 : i64, scratch_operands = 0 : i64, tpu.core_type = #tpu.core_type<tc>, window_params = [{transform_indices = @transform_0, window_bounds = array<i64: 4>}, {transform_indices = @transform_1, window_bounds = array<i64: 16, 128>}, {transform_indices = @transform_2, window_bounds = array<i64: 16, 128>}, {transform_indices = @transform_3, window_bounds = array<i64: 16, 128>}, {transform_indices = @transform_4, window_bounds = array<i64: 16, 128>}]} {
    %c3 = arith.constant 3 : index
    %0 = memref.load %arg1[%c3] : memref<4xf32, #tpu.memory_space<smem>>
    %c0 = arith.constant 0 : index
    %1 = memref.load %arg1[%c0] : memref<4xf32, #tpu.memory_space<smem>>
    %c0_0 = arith.constant 0 : index
    %c0_1 = arith.constant 0 : index
    %2 = vector.load %arg2[%c0_0, %c0_1] : memref<16x128xf32, #tpu.memory_space<vmem>>, vector<16x128xf32>
    %3 = vector.broadcast %1 : f32 to vector<16x128xf32>
    %4 = arith.mulf %3, %2 : vector<16x128xf32>
    %5 = vector.broadcast %0 : f32 to vector<16x128xf32>
    %6 = arith.addf %5, %4 : vector<16x128xf32>
    %c1 = arith.constant 1 : index
    %7 = memref.load %arg1[%c1] : memref<4xf32, #tpu.memory_space<smem>>
    %c0_2 = arith.constant 0 : index
    %c0_3 = arith.constant 0 : index
    %8 = vector.load %arg3[%c0_2, %c0_3] : memref<16x128xf32, #tpu.memory_space<vmem>>, vector<16x128xf32>
    %9 = vector.broadcast %7 : f32 to vector<16x128xf32>
    %10 = arith.mulf %9, %8 : vector<16x128xf32>
    %c2 = arith.constant 2 : index
    %11 = memref.load %arg1[%c2] : memref<4xf32, #tpu.memory_space<smem>>
    %c0_4 = arith.constant 0 : index
    %c0_5 = arith.constant 0 : index
    %12 = vector.load %arg4[%c0_4, %c0_5] : memref<16x128xf32, #tpu.memory_space<vmem>>, vector<16x128xf32>
    %13 = vector.broadcast %11 : f32 to vector<16x128xf32>
    %14 = arith.mulf %13, %12 : vector<16x128xf32>
    %15 = arith.addf %6, %14 : vector<16x128xf32>
    %16 = arith.addf %15, %10 : vector<16x128xf32>
    %c0_6 = arith.constant 0 : index
    %c0_7 = arith.constant 0 : index
    %17 = vector.load %arg5[%c0_6, %c0_7] : memref<16x128xf32, #tpu.memory_space<vmem>>, vector<16x128xf32>
    tpu.vector_store %arg5[%c0_6, %c0_7], %16 {strides = array<i32>} : memref<16x128xf32, #tpu.memory_space<vmem>>, vector<16x128xf32>,
    return
  }
  func.func @transform_0(%arg0: i32) -> i32 {
    %c0_i32 = arith.constant 0 : i32
    %c0_i32_0 = arith.constant 0 : i32
    return %c0_i32 : i32
  }
  func.func @transform_1(%arg0: i32) -> (i32, i32) {
    %c0_i32 = arith.constant 0 : i32
    %c0_i32_0 = arith.constant 0 : i32
    return %arg0, %c0_i32 : i32, i32
  }
  func.func @transform_2(%arg0: i32) -> (i32, i32) {
    %c0_i32 = arith.constant 0 : i32
    %c0_i32_0 = arith.constant 0 : i32
    return %arg0, %c0_i32 : i32, i32
  }
  func.func @transform_3(%arg0: i32) -> (i32, i32) {
    %c0_i32 = arith.constant 0 : i32
    %c0_i32_0 = arith.constant 0 : i32
    return %arg0, %c0_i32 : i32, i32
  }
  func.func @transform_4(%arg0: i32) -> (i32, i32) {
    %c0_i32 = arith.constant 0 : i32
    %c0_i32_0 = arith.constant 0 : i32
    return %arg0, %c0_i32 : i32, i32
  }
}

</mosaic_0001>

<llo_original>
// kernel: tpu_custom_call.1
$region0: #{tpu_custom_call.1}
  #allocation0 [shape = 'u32[]', space=smem, size = 0x4, offset = 0x4, fixed_abs, tag = 'smem constant byte address 0x4 - core index']
  #allocation1 [shape = 'u32[144,128]{1,0:T(1,128)}', space=vmem, size = 0x12000, scoped, tag = 'internal scratch']
  %s0 = inlined_call_operand.hbm [shape: f32[4], index: 0, kind: input, shape index: {}]
  %s1 = inlined_call_operand.hbm [shape: f32[16,128], index: 1, kind: input, shape index: {}]
  %s2 = inlined_call_operand.hbm [shape: f32[16,128], index: 2, kind: input, shape index: {}]
  %s3 = inlined_call_operand.hbm [shape: f32[16,128], index: 3, kind: input, shape index: {}]
  %s4 = inlined_call_operand.hbm [shape: f32[16,128], index: 4, kind: output, shape index: {}]
  %s5 = sld [smem:[#allocation0]]
  $region42: #{tpu_custom_call.1} parent=0
    _
  %s7 = ssub.s32 1, %s5
  %s8 = scalar_select 0, %s7, %s5
  $region1: #{tpu_custom_call.1} parent=0
    #allocation2 [shape = 'u8[512]{0}', space=smem, size = 0x200, scoped, tag = 'input window, operand 0, single buffered']
    #allocation3 [shape = 's32[1]{0}', space=sflag, size = 0x4, scoped, tag = 'scoped memory for tpu_custom_call.1']
    #allocation4 [shape = 's32[1]{0}', space=sflag, size = 0x4, scoped, tag = 'scoped memory for tpu_custom_call.1']
    #allocation5 [shape = 's32[1]{0}', space=sflag, size = 0x4, scoped, tag = 'scoped memory for tpu_custom_call.1']
    #allocation6 [shape = 'u8[8192]{0}', space=vmem, size = 0x2000, scoped, tag = 'input window, operand 1, single buffered']
    #allocation7 [shape = 'u8[8192]{0}', space=vmem, size = 0x2000, scoped, tag = 'input window, operand 2, single buffered']
    #allocation8 [shape = 's32[1]{0}', space=sflag, size = 0x4, scoped, tag = 'scoped memory for tpu_custom_call.1']
    #allocation9 [shape = 'u8[8192]{0}', space=vmem, size = 0x2000, scoped, tag = 'input window, operand 3, single buffered']
    #allocation10 [shape = 'u8[8192]{0}', space=vmem, size = 0x2000, scoped, tag = 'output window, operand 0, single buffered']
    %9 = vsyncpa [#allocation5], 0
    %10 = vsyncpa [#allocation3], 0
    %11 = vsyncpa [#allocation8], 0
    %12 = vsyncpa [#allocation4], 0
    // Predicated region
    $region2: #{tpu_custom_call.1} parent=1 // pred_check
      _
    $region3: #{tpu_custom_call.1} parent=1 // pred_check_branch
      %14 = sbr.rel (0) target = $region5
    $region4: #{tpu_custom_call.1} parent=1 // pred_region
      %s16 = ssub.s32 16, 16
      %17 = vsyncadd [#allocation5], %s16
      %20 = dma.hbm_to_smem %s0, 16, [#allocation2], [#allocation5]
    $region5: #{tpu_custom_call.1} parent=1 // pred_fallthru
      _
    // Predicated region
    $region6: #{tpu_custom_call.1} parent=1 // pred_check
      _
    $region7: #{tpu_custom_call.1} parent=1 // pred_check_branch
      %22 = sbr.rel (0) target = $region9
    $region8: #{tpu_custom_call.1} parent=1 // pred_region
      %s24 = ssub.s32 256, 256
      %25 = vsyncadd [#allocation3], %s24
      %s26 = sshll.u32 [#allocation6], 4
      %s27 = int_to_ptr.vmem [resolvable:$true] %s26
      %32 = dma.hbm_to_vmem [thread:$0]  %s1, 256, %s27, [#allocation3], 128, 128, 8
    $region9: #{tpu_custom_call.1} parent=1 // pred_fallthru
      _
    // Predicated region
    $region10: #{tpu_custom_call.1} parent=1 // pred_check
      _
    $region11: #{tpu_custom_call.1} parent=1 // pred_check_branch
      %34 = sbr.rel (0) target = $region13
    $region12: #{tpu_custom_call.1} parent=1 // pred_region
      %s36 = ssub.s32 256, 256
      %37 = vsyncadd [#allocation8], %s36
      %s38 = sshll.u32 [#allocation7], 4
      %s39 = int_to_ptr.vmem [resolvable:$true] %s38
      %44 = dma.hbm_to_vmem [thread:$0]  %s2, 256, %s39, [#allocation8], 128, 128, 8
    $region13: #{tpu_custom_call.1} parent=1 // pred_fallthru
      _
    // Predicated region
    $region14: #{tpu_custom_call.1} parent=1 // pred_check
      _
    $region15: #{tpu_custom_call.1} parent=1 // pred_check_branch
      %46 = sbr.rel (0) target = $region17
    $region16: #{tpu_custom_call.1} parent=1 // pred_region
      %s48 = ssub.s32 256, 256
      %49 = vsyncadd [#allocation8], %s48
      %s50 = sshll.u32 [#allocation9], 4
      %s51 = int_to_ptr.vmem [resolvable:$true] %s50
      %56 = dma.hbm_to_vmem [thread:$0]  %s3, 256, %s51, [#allocation8], 128, 128, 8
    $region17: #{tpu_custom_call.1} parent=1 // pred_fallthru
      _
    // Predicated region
    $region18: #{tpu_custom_call.1} parent=1 // pred_check
      _
    $region19: #{tpu_custom_call.1} parent=1 // pred_check_branch
      %58 = sbr.rel (0) target = $region21
    $region20: #{tpu_custom_call.1} parent=1 // pred_region
      %59 = dma.done [#allocation5], 16
    $region21: #{tpu_custom_call.1} parent=1 // pred_fallthru
      _
    // Predicated region
    $region22: #{tpu_custom_call.1} parent=1 // pred_check
      _
    $region23: #{tpu_custom_call.1} parent=1 // pred_check_branch
      %61 = sbr.rel (0) target = $region25
    $region24: #{tpu_custom_call.1} parent=1 // pred_region
      %62 = dma.done [#allocation3], 256
    $region25: #{tpu_custom_call.1} parent=1 // pred_fallthru
      _
    // Predicated region
    $region26: #{tpu_custom_call.1} parent=1 // pred_check
      _
    $region27: #{tpu_custom_call.1} parent=1 // pred_check_branch
      %64 = sbr.rel (0) target = $region29
    $region28: #{tpu_custom_call.1} parent=1 // pred_region
      %65 = dma.done [#allocation8], 256
    $region29: #{tpu_custom_call.1} parent=1 // pred_fallthru
      _
    // Predicated region
    $region30: #{tpu_custom_call.1} parent=1 // pred_check
      _
    $region31: #{tpu_custom_call.1} parent=1 // pred_check_branch
      %67 = sbr.rel (0) target = $region33
    $region32: #{tpu_custom_call.1} parent=1 // pred_region
      %68 = dma.done [#allocation8], 256
    $region33: #{tpu_custom_call.1} parent=1 // pred_fallthru
      _
    %69 = sfence
    %s70 = sld [smem:[#allocation2 + $0x3]]
    %s71 = sld [smem:[#allocation2]]
    %v72 = vld [vmem:[#allocation6] sm:$0xff]
    %v73 = vld [vmem:[#allocation6 + $0x8] sm:$0xff]
    %v74 = vstv %s71
    %v75 = vmul.f32 %v74, %v72
    %v76 = vmul.f32 %v74, %v73
    %v77 = vstv %s70
    %v78 = vadd.f32 %v77, %v75
    %v79 = vadd.f32 %v77, %v76
    %s80 = sld [smem:[#allocation2 + $0x1]]
    %v81 = vld [vmem:[#allocation7] sm:$0xff]
    %v82 = vld [vmem:[#allocation7 + $0x8] sm:$0xff]
    %v83 = vstv %s80
    %v84 = vmul.f32 %v83, %v81
    %v85 = vmul.f32 %v83, %v82
    %s86 = sld [smem:[#allocation2 + $0x2]]
    %v87 = vld [vmem:[#allocation9] sm:$0xff]
    %v88 = vld [vmem:[#allocation9 + $0x8] sm:$0xff]
    %v89 = vstv %s86
    %v90 = vmul.f32 %v89, %v87
    %v91 = vmul.f32 %v89, %v88
    %v92 = vadd.f32 %v78, %v90
    %v93 = vadd.f32 %v79, %v91
    %v94 = vadd.f32 %v92, %v84
    %v95 = vadd.f32 %v93, %v85
    %96 = vst [vmem:[#allocation10] sm:$0xff] %v94
    %97 = vst [vmem:[#allocation10 + $0x8] sm:$0xff] %v95
    // Predicated region
    $region34: #{tpu_custom_call.1} parent=1 // pred_check
      _
    $region35: #{tpu_custom_call.1} parent=1 // pred_check_branch
      %99 = sbr.rel (0) target = $region37
    $region36: #{tpu_custom_call.1} parent=1 // pred_region
      %s101 = ssub.s32 256, 256
      %102 = vsyncadd [#allocation4], %s101
      %s103 = sshll.u32 [#allocation10], 4
      %s104 = int_to_ptr.vmem [resolvable:$true] %s103
      %109 = dma.vmem_to_hbm [thread:$0]  %s104, 256, %s4, [#allocation4], 128, 128, 8
    $region37: #{tpu_custom_call.1} parent=1 // pred_fallthru
      _
    // Predicated region
    $region38: #{tpu_custom_call.1} parent=1 // pred_check
      _
    $region39: #{tpu_custom_call.1} parent=1 // pred_check_branch
      %111 = sbr.rel (0) target = $region41
    $region40: #{tpu_custom_call.1} parent=1 // pred_region
      %112 = dma.done [#allocation4], 256
    $region41: #{tpu_custom_call.1} parent=1 // pred_fallthru
      _
    %113 = vsyncpa [#allocation3], 1
    %114 = vsyncpa [#allocation8], 1
    %115 = vsyncpa [#allocation4], 1
    %116 = vsyncpa [#allocation5], 1

</llo_original>
